<compile_context>
chip_gen: v7x
topology: tpu7x:2x2x1
jax: 0.10.0
libtpu: 0.0.40
codegen_flags: <defaults>
</compile_context>

<pallas_src>
import functools
import math

import jax
import jax.numpy as jnp
from jax.experimental import pallas as pl
from jax.experimental.pallas import tpu as pltpu


# ----------------------------------------------------------------------------
# MobileNetV3-large config (dfem_settings['MobileNetV3']['large'])
# cfgs[:divs[2]] == first 7 entries; forward only runs features[0:7].
# ----------------------------------------------------------------------------
DFEM_CFGS_LARGE = [
    [3, 1, 16, 0, 0, 1], [3, 4, 24, 0, 0, 2], [3, 3, 24, 0, 0, 1],
    [5, 3, 40, 1, 0, 2], [5, 3, 40, 1, 0, 1], [5, 3, 40, 1, 0, 1],
    [3, 6, 80, 0, 1, 2],
]
DFEM_DIVS = [0, 4, 7, 13, 16]


def _make_divisible(v, divisor, min_value=None):
    if min_value is None:
        min_value = divisor
    new_v = max(min_value, int(v + divisor / 2) // divisor * divisor)
    if new_v < 0.9 * v:
        new_v += divisor
    return new_v


# ----------------------------------------------------------------------------
# In-kernel math helpers (f32 VPU/EUP epilogue)
# ----------------------------------------------------------------------------
def _act(y, kind):
    if kind == "relu":
        return jnp.maximum(y, 0.0)
    if kind == "hswish":                         # x * relu6(x + 3) / 6
        return y * (jnp.clip(y + 3.0, 0.0, 6.0) * (1.0 / 6.0))
    return y


def _h_sigmoid(y):
    return jnp.clip(y + 3.0, 0.0, 6.0) * (1.0 / 6.0)


_PARALLEL_1D = pltpu.CompilerParams(dimension_semantics=("parallel",))


# ----------------------------------------------------------------------------
# Stem: row-tiled matmul + folded-BN bias + hswish kernel
# ----------------------------------------------------------------------------
def _matmul_bias_act_kernel(x_ref, w_ref, b_ref, o_ref, *, act):
    y = jnp.dot(x_ref[...], w_ref[...], preferred_element_type=jnp.float32)
    y = y + b_ref[...]
    o_ref[...] = _act(y, act).astype(o_ref.dtype)


def _tiled_matmul_bias_act(x, w, bias, act, tile_m=256):
    # x: (M, K) bf16 ; w: (K, N) bf16 (BN scale folded) ; bias: (N,) f32 -> (M, N) f32
    m, k = x.shape
    n = w.shape[1]
    tm = min(tile_m, max(8, ((m + 7) // 8) * 8))
    m_pad = ((m + tm - 1) // tm) * tm
    if m_pad != m:
        x = jnp.pad(x, ((0, m_pad - m), (0, 0)))
    b2 = bias.reshape(1, n).astype(jnp.float32)
    out = pl.pallas_call(
        functools.partial(_matmul_bias_act_kernel, act=act),
        out_shape=jax.ShapeDtypeStruct((m_pad, n), jnp.float32),
        grid=(m_pad // tm,),
        in_specs=[
            pl.BlockSpec((tm, k), lambda i: (i, 0)),
            pl.BlockSpec((k, n), lambda i: (0, 0)),
            pl.BlockSpec((1, n), lambda i: (0, 0)),
        ],
        out_specs=pl.BlockSpec((tm, n), lambda i: (i, 0)),
        compiler_params=_PARALLEL_1D,
    )(x, w, b2)
    return out[:m]


def _extract_patches(x, k, stride, pad):
    # Host-side im2col, only used for the tiny 3-channel stem conv (27 taps).
    b, h, w, c = x.shape
    xp = jnp.pad(x, ((0, 0), (pad, pad), (pad, pad), (0, 0)))
    ho = (h + 2 * pad - k) // stride + 1
    wo = (w + 2 * pad - k) // stride + 1
    taps = [xp[:, dy:dy + stride * ho:stride, dx:dx + stride * wo:stride, :]
            for dy in range(k) for dx in range(k)]
    return jnp.concatenate(taps, axis=-1), ho, wo      # (B, Ho, Wo, k*k*C)


def stem_forward(x, p):
    # x: (B, H, W, 3) f32 -> (B, H/2, W/2, 16) f32
    b, _, _, c = x.shape
    patches, ho, wo = _extract_patches(x, 3, 2, 1)
    xm = patches.reshape(b * ho * wo, 9 * c).astype(jnp.bfloat16)
    out = _tiled_matmul_bias_act(xm, p["w"], p["b"], act="hswish")
    return out.reshape(b, ho, wo, -1)


# ----------------------------------------------------------------------------
# Fused inverted-residual block kernel (one pallas_call per block, grid over batch)
# ----------------------------------------------------------------------------
def _block_kernel(*refs, H, W, k, s, pad, has_pw, use_se, act, identity):
    it = iter(refs)
    x_ref = next(it)
    w1_ref = b1_ref = None
    if has_pw:
        w1_ref, b1_ref = next(it), next(it)
    wd_ref, bd_ref = next(it), next(it)
    ws1_ref = bs1_ref = ws2_ref = bs2_ref = None
    if use_se:
        ws1_ref, bs1_ref, ws2_ref, bs2_ref = next(it), next(it), next(it), next(it)
    w2_ref, b2_ref = next(it), next(it)
    o_ref = next(it)

    hp, wp = H + 2 * pad, W + 2 * pad
    hf, wf = hp - k + 1, wp - k + 1                    # stride-1 dw output extent
    ho, wo = (hf - 1) // s + 1, (wf - 1) // s + 1

    xp = x_ref[0]                                      # (hp, wp, cin) f32, zero-padded
    cin = xp.shape[-1]

    # ---- 1x1 expansion on the MXU (bf16 in / f32 acc), folded BN + act ----------
    if has_pw:
        e = jnp.dot(xp.reshape(hp * wp, cin).astype(jnp.bfloat16), w1_ref[...],
                    preferred_element_type=jnp.float32)
        e = _act(e + b1_ref[...], act)
        ec = e.shape[-1]
        # Re-zero the spatial padding ring so the depthwise sees true zero padding
        # (exact for any folded-BN shift, not just the eval-mode shift == 0 case).
        ridx = jax.lax.broadcasted_iota(jnp.int32, (hp * wp, 1), 0)
        rr, cc = ridx // wp, ridx % wp
        interior = ((rr >= pad) & (rr < pad + H) & (cc >= pad) & (cc < pad + W))
        ep = (e * interior.astype(jnp.float32)).reshape(hp, wp, ec)
    else:
        ep, ec = xp, cin

    # ---- depthwise conv: unrolled tap accumulation on the VPU --------------------
    wd = wd_ref[...]                                   # (k*k, ec) f32, BN scale folded
    acc = None
    t = 0
    for dy in range(k):
        for dx in range(k):
            tap = jax.lax.slice(ep, (dy, dx, 0), (dy + hf, dx + wf, ec))
            term = tap * wd[t:t + 1, :]
            acc = term if acc is None else acc + term
            t += 1
    if s != 1:                                         # subsample the stride-1 result
        acc = jnp.concatenate(
            [jax.lax.slice(acc, (s * i, 0, 0), (s * i + 1, wf, ec)) for i in range(ho)],
            axis=0)
        acc = jnp.concatenate(
            [jax.lax.slice(acc, (0, s * j, 0), (ho, s * j + 1, ec)) for j in range(wo)],
            axis=1)
    d = (acc + bd_ref[...]).reshape(ho * wo, ec)       # dw + folded BN shift

    # ---- squeeze-excite (exact per-image pooling inside the per-batch step) ------
    def se_gate(v):
        pooled = jnp.mean(v, axis=0, keepdims=True)                          # (1, ec)
        h1 = jnp.maximum(
            jnp.dot(pooled, ws1_ref[...], preferred_element_type=jnp.float32)
            + bs1_ref[...], 0.0)
        g = jnp.dot(h1, ws2_ref[...], preferred_element_type=jnp.float32) + bs2_ref[...]
        return _h_sigmoid(g)                                                 # (1, ec)

    if has_pw:                                         # pw, act, dw, bn, SE, act
        if use_se:
            d = d * se_gate(d)
        d = _act(d, act)
    else:                                              # dw, bn, act, SE
        d = _act(d, act)
        if use_se:
            d = d * se_gate(d)

    # ---- 1x1 linear projection on the MXU (+ fused residual) ---------------------
    y = jnp.dot(d.astype(jnp.bfloat16), w2_ref[...],
                preferred_element_type=jnp.float32) + b2_ref[...]
    if identity:                                       # s == 1 and cin == cout
        res = jax.lax.slice(xp, (pad, pad, 0), (pad + H, pad + W, cin))
        y = y + res.reshape(H * W, cin)
    o_ref[0] = y.reshape(ho, wo, y.shape[-1]).astype(o_ref.dtype)


def _full_spec(shape):
    n = len(shape)
    return pl.BlockSpec(shape, lambda i, _n=n: (0,) * _n)


def block_forward(x, blk):
    # x: (B, H, W, Cin) f32 -> (B, Ho, Wo, Cout) f32, one fused pallas_call.
    b, h, w, _ = x.shape
    k, s = blk["k"], blk["s"]
    pad = (k - 1) // 2
    ho = (h + 2 * pad - k) // s + 1
    wo = (w + 2 * pad - k) // s + 1
    cout = blk["cout"]

    xp = jnp.pad(x, ((0, 0), (pad, pad), (pad, pad), (0, 0)))
    hp, wp = h + 2 * pad, w + 2 * pad

    args = [xp]
    if blk["has_pw"]:
        args += [blk["w1"], blk["b1"]]
    args += [blk["wd"], blk["bd"]]
    if blk["use_se"]:
        args += [blk["ws1"], blk["bs1"], blk["ws2"], blk["bs2"]]
    args += [blk["w2"], blk["b2"]]

    in_specs = [pl.BlockSpec((1, hp, wp, x.shape[-1]), lambda i: (i, 0, 0, 0))]
    in_specs += [_full_spec(a.shape) for a in args[1:]]

    kern = functools.partial(
        _block_kernel, H=h, W=w, k=k, s=s, pad=pad,
        has_pw=blk["has_pw"], use_se=blk["use_se"],
        act=("hswish" if blk["use_hs"] else "relu"), identity=blk["identity"])

    return pl.pallas_call(
        kern,
        out_shape=jax.ShapeDtypeStruct((b, ho, wo, cout), jnp.float32),
        grid=(b,),
        in_specs=in_specs,
        out_specs=pl.BlockSpec((1, ho, wo, cout), lambda i: (i, 0, 0, 0)),
        compiler_params=_PARALLEL_1D,
    )(*args)


# ----------------------------------------------------------------------------
# Parameters (deterministic, mirroring _initialize_weights; BN scale pre-folded)
# ----------------------------------------------------------------------------
def _kaiming_conv(key, k, cin, cout):
    fan_out = cout * k * k                       # kaiming_normal_, mode='fan_out'
    std = math.sqrt(2.0 / fan_out)
    return std * jax.random.normal(key, (k, k, cin, cout), jnp.float32)


def _bn_fold(c, eps=1e-5):
    gamma = jnp.ones((c,), jnp.float32)
    beta = jnp.zeros((c,), jnp.float32)
    mean = jnp.zeros((c,), jnp.float32)
    var = jnp.ones((c,), jnp.float32)
    scale = gamma * jax.lax.rsqrt(var + eps)
    shift = beta - mean * scale
    return scale, shift


def build_params(key):
    keys = iter(jax.random.split(key, 64))
    width_mult = 1.0
    cin = _make_divisible(16 * width_mult, 8)

    # Stem 3x3/s2 conv: fold BN scale into the (27, 16) weight, keep only the shift.
    w = _kaiming_conv(next(keys), 3, 3, cin).reshape(9 * 3, cin)
    sc, sh = _bn_fold(cin)
    params = {"stem": {"w": (w * sc[None, :]).astype(jnp.bfloat16), "b": sh},
              "blocks": []}

    for k_, t, c, use_se, use_hs, s in DFEM_CFGS_LARGE:
        cout = _make_divisible(c * width_mult, 8)
        exp = _make_divisible(cin * t, 8)
        blk = {"k": k_, "s": s, "use_se": bool(use_se), "use_hs": bool(use_hs),
               "has_pw": cin != exp, "identity": (s == 1 and cin == cout),
               "cout": cout}
        if blk["has_pw"]:
            w1 = _kaiming_conv(next(keys), 1, cin, exp)[0, 0]            # (cin, exp)
            sc, sh = _bn_fold(exp)
            blk["w1"] = (w1 * sc[None, :]).astype(jnp.bfloat16)
            blk["b1"] = sh.reshape(1, exp)
        wd = _kaiming_conv(next(keys), k_, 1, exp)[:, :, 0, :].reshape(k_ * k_, exp)
        sc, sh = _bn_fold(exp)
        blk["wd"] = wd * sc[None, :]                                      # f32 (VPU)
        blk["bd"] = sh.reshape(1, exp)
        if use_se:
            cr = _make_divisible(exp // 4, 8)
            blk["ws1"] = 0.001 * jax.random.normal(next(keys), (exp, cr), jnp.float32)
            blk["bs1"] = jnp.zeros((1, cr), jnp.float32)
            blk["ws2"] = 0.001 * jax.random.normal(next(keys), (cr, exp), jnp.float32)
            blk["bs2"] = jnp.zeros((1, exp), jnp.float32)
        w2 = _kaiming_conv(next(keys), 1, exp, cout)[0, 0]               # (exp, cout)
        sc, sh = _bn_fold(cout)
        blk["w2"] = (w2 * sc[None, :]).astype(jnp.bfloat16)
        blk["b2"] = sh.reshape(1, cout)
        params["blocks"].append(blk)
        cin = cout
    return params


# ----------------------------------------------------------------------------
# Forward (matches DetailFeatureEnhanceModuleABL.forward)
# ----------------------------------------------------------------------------
def dfem_forward(x_nchw, params):
    x = jnp.transpose(x_nchw, (0, 2, 3, 1))                  # NCHW -> NHWC
    feats = [functools.partial(stem_forward, p=params["stem"])]
    feats += [functools.partial(block_forward, blk=b) for b in params["blocks"]]
    outs = []
    out = x
    for i in range(0, 2):
        for f in feats[DFEM_DIVS[i]:DFEM_DIVS[i + 1]]:
            out = f(out)
        outs.append(out)
    outs_nchw = [jnp.transpose(o, (0, 3, 1, 2)) for o in outs]   # back to NCHW
    return outs_nchw, outs_nchw[-1]


if __name__ == "__main__":
    key = jax.random.PRNGKey(0)
    pkey, xkey = jax.random.split(key)
    params = build_params(pkey)
    x = jax.random.normal(xkey, (2, 3, 16, 16), jnp.float32)     # NCHW input
    outs, last = dfem_forward(x, params)
    for o in outs:
        jax.block_until_ready(o)
    jax.block_until_ready(last)
    assert outs[0].shape == (2, 24, 4, 4) and outs[1].shape == (2, 40, 2, 2)
    assert last.shape == (2, 40, 2, 2)
    print("KERNEL_OK")
</pallas_src>

<mosaic_0001>
module attributes {stable_mosaic.version = 11 : i64} {
  func.func @_matmul_bias_act_kernel(%arg0: i32, %arg1: memref<128x27xbf16, #tpu.memory_space<vmem>>, %arg2: memref<27x16xbf16, #tpu.memory_space<vmem>>, %arg3: memref<1x16xf32, #tpu.memory_space<vmem>>, %arg4: memref<128x16xf32, #tpu.memory_space<vmem>>) attributes {dimension_semantics = [#tpu.dimension_semantics<parallel>], iteration_bounds = array<i64: 1>, scalar_prefetch = 0 : i64, scratch_operands = 0 : i64, tpu.core_type = #tpu.core_type<tc>, window_params = [{transform_indices = @transform_0, window_bounds = array<i64: 128, 27>}, {pipeline_mode = #tpu.pipeline_mode<synchronous>, transform_indices = @transform_1, window_bounds = array<i64: 27, 16>}, {pipeline_mode = #tpu.pipeline_mode<synchronous>, transform_indices = @transform_2, window_bounds = array<i64: 1, 16>}, {transform_indices = @transform_3, window_bounds = array<i64: 128, 16>}]} {
    %c0 = arith.constant 0 : index
    %c0_0 = arith.constant 0 : index
    %0 = vector.load %arg1[%c0, %c0_0] : memref<128x27xbf16, #tpu.memory_space<vmem>>, vector<128x27xbf16>
    %c0_1 = arith.constant 0 : index
    %c0_2 = arith.constant 0 : index
    %1 = vector.load %arg2[%c0_1, %c0_2] : memref<27x16xbf16, #tpu.memory_space<vmem>>, vector<27x16xbf16>
    %cst = arith.constant dense<0.000000e+00> : vector<128x16xf32>
    %2 = tpu.matmul %0, %1, %cst {dimension_numbers = #tpu.dot_dimension_numbers<[1], [0], [0], [1], [0, 0, 1, 1], [], []>} : vector<128x27xbf16>, vector<27x16xbf16>, vector<128x16xf32> -> vector<128x16xf32>
    %c0_3 = arith.constant 0 : index
    %c0_4 = arith.constant 0 : index
    %3 = vector.load %arg3[%c0_3, %c0_4] : memref<1x16xf32, #tpu.memory_space<vmem>>, vector<1x16xf32>
    %4 = vector.broadcast %3 : vector<1x16xf32> to vector<128x16xf32>
    %5 = arith.addf %2, %4 : vector<128x16xf32>
    %cst_5 = arith.constant 3.000000e+00 : f32
    %6 = vector.broadcast %cst_5 : f32 to vector<128x16xf32>
    %7 = arith.addf %5, %6 : vector<128x16xf32>
    %cst_6 = arith.constant 0.000000e+00 : f32
    %cst_7 = arith.constant 6.000000e+00 : f32
    %8 = vector.broadcast %cst_6 : f32 to vector<128x16xf32>
    %9 = arith.maximumf %8, %7 : vector<128x16xf32>
    %10 = vector.broadcast %cst_7 : f32 to vector<128x16xf32>
    %11 = arith.minimumf %10, %9 : vector<128x16xf32>
    %cst_8 = arith.constant 0.166666672 : f32
    %12 = vector.broadcast %cst_8 : f32 to vector<128x16xf32>
    %13 = arith.mulf %11, %12 : vector<128x16xf32>
    %14 = arith.mulf %5, %13 : vector<128x16xf32>
    %c0_9 = arith.constant 0 : index
    %c0_10 = arith.constant 0 : index
    %15 = vector.load %arg4[%c0_9, %c0_10] : memref<128x16xf32, #tpu.memory_space<vmem>>, vector<128x16xf32>
    tpu.vector_store %arg4[%c0_9, %c0_10], %14 {strides = array<i32>} : memref<128x16xf32, #tpu.memory_space<vmem>>, vector<128x16xf32>,
    return
  }
  func.func @transform_0(%arg0: i32) -> (i32, i32) {
    %c0_i32 = arith.constant 0 : i32
    %c0_i32_0 = arith.constant 0 : i32
    return %arg0, %c0_i32 : i32, i32
  }
  func.func @transform_1(%arg0: i32) -> (i32, i32) {
    %c0_i32 = arith.constant 0 : i32
    %c0_i32_0 = arith.constant 0 : i32
    %c0_i32_1 = arith.constant 0 : i32
    return %c0_i32, %c0_i32_0 : i32, i32
  }
  func.func @transform_2(%arg0: i32) -> (i32, i32) {
    %c0_i32 = arith.constant 0 : i32
    %c0_i32_0 = arith.constant 0 : i32
    %c0_i32_1 = arith.constant 0 : i32
    return %c0_i32, %c0_i32_0 : i32, i32
  }
  func.func @transform_3(%arg0: i32) -> (i32, i32) {
    %c0_i32 = arith.constant 0 : i32
    %c0_i32_0 = arith.constant 0 : i32
    return %arg0, %c0_i32 : i32, i32
  }
}

</mosaic_0001>

<llo_original>
// kernel: tpu_custom_call.1
$region0: #{tpu_custom_call.1}
  #allocation0 [shape = 'u32[]', space=smem, size = 0x4, offset = 0x4, fixed_abs, tag = 'smem constant byte address 0x4 - core index']
  #allocation1 [shape = 'u32[144,128]{1,0:T(1,128)}', space=vmem, size = 0x12000, scoped, tag = 'internal scratch']
  %s0 = inlined_call_operand.vmem [shape: bf16[128,27], index: 0, kind: input, shape index: {}]
  %s1 = inlined_call_operand.vmem [shape: bf16[27,16], index: 1, kind: input, shape index: {}]
  %s2 = inlined_call_operand.vmem [shape: f32[1,16], index: 2, kind: input, shape index: {}]
  %s3 = inlined_call_operand.vmem [shape: f32[128,16], index: 3, kind: output, shape index: {}]
  %s4 = sld [smem:[#allocation0]]
  $region22: #{tpu_custom_call.1} parent=0
    _
  %s6 = ssub.s32 1, %s4
  %s7 = scalar_select 0, %s6, %s4
  // Predicated region
  $region2: #{tpu_custom_call.1} parent=0 // pred_check
    _
  $region3: #{tpu_custom_call.1} parent=0 // pred_check_branch
    %9 = sbr.rel (0) target = $region5
  $region4: #{tpu_custom_call.1} parent=0 // pred_region
    _
  $region5: #{tpu_custom_call.1} parent=0 // pred_fallthru
    _
  // Predicated region
  $region6: #{tpu_custom_call.1} parent=0 // pred_check
    _
  $region7: #{tpu_custom_call.1} parent=0 // pred_check_branch
    %11 = sbr.rel (0) target = $region9
  $region8: #{tpu_custom_call.1} parent=0 // pred_region
    _
  $region9: #{tpu_custom_call.1} parent=0 // pred_fallthru
    _
  // Predicated region
  $region10: #{tpu_custom_call.1} parent=0 // pred_check
    _
  $region11: #{tpu_custom_call.1} parent=0 // pred_check_branch
    %13 = sbr.rel (0) target = $region13
  $region12: #{tpu_custom_call.1} parent=0 // pred_region
    _
  $region13: #{tpu_custom_call.1} parent=0 // pred_fallthru
    _
  %v15 = vld [vmem:[%s0] sm:$0xf]
  %v16 = vld [vmem:[%s0 + $0x4] sm:$0xf]
  %v17 = vld [vmem:[%s0 + $0x8] sm:$0xf]
  %v18 = vld [vmem:[%s0 + $0xc] sm:$0xf]
  %v19 = vld [vmem:[%s0 + $0x10] sm:$0xf]
  %v20 = vld [vmem:[%s0 + $0x14] sm:$0xf]
  %v21 = vld [vmem:[%s0 + $0x18] sm:$0xf]
  %v22 = vld [vmem:[%s0 + $0x1c] sm:$0xf]
  %v23 = vld [vmem:[%s0 + $0x20] sm:$0xf]
  %v24 = vld [vmem:[%s0 + $0x24] sm:$0xf]
  %v25 = vld [vmem:[%s0 + $0x28] sm:$0xf]
  %v26 = vld [vmem:[%s0 + $0x2c] sm:$0xf]
  %v27 = vld [vmem:[%s0 + $0x30] sm:$0xf]
  %v28 = vld [vmem:[%s0 + $0x34] sm:$0xf]
  %v29 = vld [vmem:[%s0 + $0x38] sm:$0xf]
  %v30 = vld [vmem:[%s0 + $0x3c] sm:$0xf]
  %v31 = vld [vmem:[%s1] sm:$0xf]
  %v32 = vld [vmem:[%s1 + $0x4] sm:$0xf]
  %v33 = vld [vmem:[%s1 + $0x8] sm:$0xf]
  %v34 = vld [vmem:[%s1 + $0xc] sm:$0x3]
  %v35 = vld [vmem:[%s2] sm:$0x1]
  %v37 = vlaneseq
  %v38 = vshrl.u32 %v37, 7
  %v39 = vsub.s32 0, %v38
  %v40 = vrot.slane %v35, %v39
  %v58 = vunpack.c.l.b16 %v15
  %v59 = vunpack.c.l.b16 %v16
  %v60 = vunpack.c.l.b16 %v17
  %v61 = vunpack.c.l.b16 %v18
  %v62 = vunpack.c.l.b16 %v19
  %v63 = vunpack.c.l.b16 %v20
  %v64 = vunpack.c.l.b16 %v21
  %v65 = vunpack.c.l.b16 %v22
  %v66 = vunpack.c.l.b16 %v23
  %v67 = vunpack.c.l.b16 %v24
  %v68 = vunpack.c.l.b16 %v25
  %v69 = vunpack.c.l.b16 %v26
  %v70 = vunpack.c.l.b16 %v27
  %v71 = vunpack.c.l.b16 %v28
  %v72 = vunpack.c.l.b16 %v29
  %v73 = vunpack.c.l.b16 %v30
  %v74 = vpack.c.b16 %v59, %v58
  %v75 = vpack.c.b16 %v61, %v60
  %v76 = vpack.c.b16 %v63, %v62
  %v77 = vpack.c.b16 %v65, %v64
  %v78 = vpack.c.b16 %v67, %v66
  %v79 = vpack.c.b16 %v69, %v68
  %v80 = vpack.c.b16 %v71, %v70
  %v81 = vpack.c.b16 %v73, %v72
  %v86 = vunpack.c.l.b16 %v31
  %v87 = vunpack.c.l.b16 %v32
  %v88 = vunpack.c.l.b16 %v33
  %v89 = vunpack.c.l.b16 %v34
  %v90 = vpack.c.b16 %v87, %v86
  %v91 = vpack.c.b16 %v89, %v88
  %vm93 = vcmask 220160
  %v95 = vsel %vm93, %v74, 0
  %v98 = vsel %vm93, %v75, 0
  %v101 = vsel %vm93, %v76, 0
  %v104 = vsel %vm93, %v77, 0
  %v107 = vsel %vm93, %v78, 0
  %v110 = vsel %vm93, %v79, 0
  %v113 = vsel %vm93, %v80, 0
  %v116 = vsel %vm93, %v81, 0
  %vm118 = vcmask 1044480
  %vm119 = vcmask 1045504
  %v120 = vsel %vm118, 4294967295, 65535
  %v121 = vsel %vm119, %v120, 0
  %v123 = vand.u32 %v91, %v121
  %125 = vmatprep.subr.bf16.mxu0 0
  %126 = vmatpush1.bf16.msra.mxu0 %v90
  %127 = vmatprep.subr.bf16.mxu0 0
  %128 = vmatpush1.bf16.msra.mxu0 %v123
  %129 = vmatprep.subr.bf16.mxu0 0
  %130 = vmatpush1.bf16.msra.mxu0 0
  %131 = vmatprep.subr.bf16.mxu0 0
  %132 = vmatpush1.bf16.msra.mxu0 0
  %133 = vmatprep.subr.bf16.mxu0 0
  %134 = vmatpush1.bf16.msra.mxu0 0
  %135 = vmatprep.subr.bf16.mxu0 0
  %136 = vmatpush1.bf16.msra.mxu0 0
  %137 = vmatprep.subr.bf16.mxu0 0
  %138 = vmatpush1.bf16.msra.mxu0 0
  %139 = vmatprep.subr.bf16.mxu0 0
  %140 = vmatpush1.bf16.msra.mxu0 0
  %141 = vmatprep.subr.bf16.mxu0 0
  %142 = vmatpush1.bf16.msra.mxu0 0
  %143 = vmatprep.subr.bf16.mxu0 0
  %144 = vmatpush1.bf16.msra.mxu0 0
  %145 = vmatprep.subr.bf16.mxu0 0
  %146 = vmatpush1.bf16.msra.mxu0 0
  %147 = vmatprep.subr.bf16.mxu0 0
  %148 = vmatpush1.bf16.msra.mxu0 0
  %149 = vmatprep.subr.bf16.mxu0 0
  %150 = vmatpush1.bf16.msra.mxu0 0
  %151 = vmatprep.subr.bf16.mxu0 0
  %152 = vmatpush1.bf16.msra.mxu0 0
  %153 = vmatprep.subr.bf16.mxu0 0
  %154 = vmatpush1.bf16.msra.mxu0 0
  %155 = vmatprep.subr.bf16.mxu0 0
  %156 = vmatpush1.bf16.msra.mxu0 0
  %157 = vmatprep.mubr.bf16.mxu0 0
  %158 = vmatmul.mubr.bf16.gmra.mrb[0].mxu0 %v95
  %v159 = vpop.f32.mrb[0].mxu0
  %v160 = vadd.f32 %v40, %v159
  %v161 = vpop.f32.mrb[0].mxu0
  %v162 = vpop.f32.mrb[0].mxu0
  %v163 = vadd.f32 %v40, %v162
  %v164 = vpop.f32.mrb[0].mxu0
  %165 = vmatprep.mubr.bf16.mxu0 0
  %166 = vmatmul.mubr.bf16.gmra.mrb[0].mxu0 %v98
  %v167 = vpop.f32.mrb[0].mxu0
  %v168 = vadd.f32 %v40, %v167
  %v169 = vpop.f32.mrb[0].mxu0
  %v170 = vpop.f32.mrb[0].mxu0
  %v171 = vadd.f32 %v40, %v170
  %v172 = vpop.f32.mrb[0].mxu0
  %173 = vmatprep.mubr.bf16.mxu0 0
  %174 = vmatmul.mubr.bf16.gmra.mrb[0].mxu0 %v101
  %v175 = vpop.f32.mrb[0].mxu0
  %v176 = vadd.f32 %v40, %v175
  %v177 = vpop.f32.mrb[0].mxu0
  %v178 = vpop.f32.mrb[0].mxu0
  %v179 = vadd.f32 %v40, %v178
  %v180 = vpop.f32.mrb[0].mxu0
  %181 = vmatprep.mubr.bf16.mxu0 0
  %182 = vmatmul.mubr.bf16.gmra.mrb[0].mxu0 %v104
  %v183 = vpop.f32.mrb[0].mxu0
  %v184 = vadd.f32 %v40, %v183
  %v185 = vpop.f32.mrb[0].mxu0
  %v186 = vpop.f32.mrb[0].mxu0
  %v187 = vadd.f32 %v40, %v186
  %v188 = vpop.f32.mrb[0].mxu0
  %189 = vmatprep.mubr.bf16.mxu0 0
  %190 = vmatmul.mubr.bf16.gmra.mrb[0].mxu0 %v107
  %v191 = vpop.f32.mrb[0].mxu0
  %v192 = vadd.f32 %v40, %v191
  %v193 = vpop.f32.mrb[0].mxu0
  %v194 = vpop.f32.mrb[0].mxu0
  %v195 = vadd.f32 %v40, %v194
  %v196 = vpop.f32.mrb[0].mxu0
  %197 = vmatprep.mubr.bf16.mxu0 0
  %198 = vmatmul.mubr.bf16.gmra.mrb[0].mxu0 %v110
  %v199 = vpop.f32.mrb[0].mxu0
  %v200 = vadd.f32 %v40, %v199
  %v201 = vpop.f32.mrb[0].mxu0
  %v202 = vpop.f32.mrb[0].mxu0
  %v203 = vadd.f32 %v40, %v202
  %v204 = vpop.f32.mrb[0].mxu0
  %205 = vmatprep.mubr.bf16.mxu0 0
  %206 = vmatmul.mubr.bf16.gmra.mrb[0].mxu0 %v113
  %v207 = vpop.f32.mrb[0].mxu0
  %v208 = vadd.f32 %v40, %v207
  %v209 = vpop.f32.mrb[0].mxu0
  %v210 = vpop.f32.mrb[0].mxu0
  %v211 = vadd.f32 %v40, %v210
  %v212 = vpop.f32.mrb[0].mxu0
  %213 = vmatprep.mubr.bf16.mxu0 0
  %214 = vmatmul.mubr.bf16.gmra.mrb[0].mxu0 %v116
  %v215 = vpop.f32.mrb[0].mxu0
  %v216 = vadd.f32 %v40, %v215
  %v217 = vpop.f32.mrb[0].mxu0
  %v218 = vpop.f32.mrb[0].mxu0
  %v219 = vadd.f32 %v40, %v218
  %v220 = vpop.f32.mrb[0].mxu0
  %221 = vdwg.mxu0
  %v222 = vadd.f32 %v160, 3.0
  %v223 = vadd.f32 %v163, 3.0
  %v224 = vadd.f32 %v168, 3.0
  %v225 = vadd.f32 %v171, 3.0
  %v226 = vadd.f32 %v176, 3.0
  %v227 = vadd.f32 %v179, 3.0
  %v228 = vadd.f32 %v184, 3.0
  %v229 = vadd.f32 %v187, 3.0
  %v230 = vadd.f32 %v192, 3.0
  %v231 = vadd.f32 %v195, 3.0
  %v232 = vadd.f32 %v200, 3.0
  %v233 = vadd.f32 %v203, 3.0
  %v234 = vadd.f32 %v208, 3.0
  %v235 = vadd.f32 %v211, 3.0
  %v236 = vadd.f32 %v216, 3.0
  %v237 = vadd.f32 %v219, 3.0
  %v238 = vmax.f32 %v222, 0.0
  %v239 = vmax.f32 %v223, 0.0
  %v240 = vmax.f32 %v224, 0.0
  %v241 = vmax.f32 %v225, 0.0
  %v242 = vmax.f32 %v226, 0.0
  %v243 = vmax.f32 %v227, 0.0
  %v244 = vmax.f32 %v228, 0.0
  %v245 = vmax.f32 %v229, 0.0
  %v246 = vmax.f32 %v230, 0.0
  %v247 = vmax.f32 %v231, 0.0
  %v248 = vmax.f32 %v232, 0.0
  %v249 = vmax.f32 %v233, 0.0
  %v250 = vmax.f32 %v234, 0.0
  %v251 = vmax.f32 %v235, 0.0
  %v252 = vmax.f32 %v236, 0.0
  %v253 = vmax.f32 %v237, 0.0
  %v254 = vmin.f32 %v238, 6.0
  %v255 = vmin.f32 %v239, 6.0
  %v256 = vmin.f32 %v240, 6.0
  %v257 = vmin.f32 %v241, 6.0
  %v258 = vmin.f32 %v242, 6.0
  %v259 = vmin.f32 %v243, 6.0
  %v260 = vmin.f32 %v244, 6.0
  %v261 = vmin.f32 %v245, 6.0
  %v262 = vmin.f32 %v246, 6.0
  %v263 = vmin.f32 %v247, 6.0
  %v264 = vmin.f32 %v248, 6.0
  %v265 = vmin.f32 %v249, 6.0
  %v266 = vmin.f32 %v250, 6.0
  %v267 = vmin.f32 %v251, 6.0
  %v268 = vmin.f32 %v252, 6.0
  %v269 = vmin.f32 %v253, 6.0
  %v270 = vmul.f32 %v254, 0.16666667
  %v271 = vmul.f32 %v255, 0.16666667
  %v272 = vmul.f32 %v256, 0.16666667
  %v273 = vmul.f32 %v257, 0.16666667
  %v274 = vmul.f32 %v258, 0.16666667
  %v275 = vmul.f32 %v259, 0.16666667
  %v276 = vmul.f32 %v260, 0.16666667
  %v277 = vmul.f32 %v261, 0.16666667
  %v278 = vmul.f32 %v262, 0.16666667
  %v279 = vmul.f32 %v263, 0.16666667
  %v280 = vmul.f32 %v264, 0.16666667
  %v281 = vmul.f32 %v265, 0.16666667
  %v282 = vmul.f32 %v266, 0.16666667
  %v283 = vmul.f32 %v267, 0.16666667
  %v284 = vmul.f32 %v268, 0.16666667
  %v285 = vmul.f32 %v269, 0.16666667
  %v286 = vmul.f32 %v160, %v270
  %v287 = vmul.f32 %v163, %v271
  %v288 = vmul.f32 %v168, %v272
  %v289 = vmul.f32 %v171, %v273
  %v290 = vmul.f32 %v176, %v274
  %v291 = vmul.f32 %v179, %v275
  %v292 = vmul.f32 %v184, %v276
  %v293 = vmul.f32 %v187, %v277
  %v294 = vmul.f32 %v192, %v278
  %v295 = vmul.f32 %v195, %v279
  %v296 = vmul.f32 %v200, %v280
  %v297 = vmul.f32 %v203, %v281
  %v298 = vmul.f32 %v208, %v282
  %v299 = vmul.f32 %v211, %v283
  %v300 = vmul.f32 %v216, %v284
  %v301 = vmul.f32 %v219, %v285
  %vm302 = vcmask 130048
  %303 = vst.msk [vmem:[%s3] sm:$0xff] %vm302, %v286
  %304 = vst.msk [vmem:[%s3 + $0x8] sm:$0xff] %vm302, %v287
  %305 = vst.msk [vmem:[%s3 + $0x10] sm:$0xff] %vm302, %v288
  %306 = vst.msk [vmem:[%s3 + $0x18] sm:$0xff] %vm302, %v289
  %307 = vst.msk [vmem:[%s3 + $0x20] sm:$0xff] %vm302, %v290
  %308 = vst.msk [vmem:[%s3 + $0x28] sm:$0xff] %vm302, %v291
  %309 = vst.msk [vmem:[%s3 + $0x30] sm:$0xff] %vm302, %v292
  %310 = vst.msk [vmem:[%s3 + $0x38] sm:$0xff] %vm302, %v293
  %311 = vst.msk [vmem:[%s3 + $0x40] sm:$0xff] %vm302, %v294
  %312 = vst.msk [vmem:[%s3 + $0x48] sm:$0xff] %vm302, %v295
  %313 = vst.msk [vmem:[%s3 + $0x50] sm:$0xff] %vm302, %v296
  %314 = vst.msk [vmem:[%s3 + $0x58] sm:$0xff] %vm302, %v297
  %315 = vst.msk [vmem:[%s3 + $0x60] sm:$0xff] %vm302, %v298
  %316 = vst.msk [vmem:[%s3 + $0x68] sm:$0xff] %vm302, %v299
  %317 = vst.msk [vmem:[%s3 + $0x70] sm:$0xff] %vm302, %v300
  %318 = vst.msk [vmem:[%s3 + $0x78] sm:$0xff] %vm302, %v301
  // Predicated region
  $region14: #{tpu_custom_call.1} parent=0 // pred_check
    _
  $region15: #{tpu_custom_call.1} parent=0 // pred_check_branch
    %320 = sbr.rel (0) target = $region17
  $region16: #{tpu_custom_call.1} parent=0 // pred_region
    _
  $region17: #{tpu_custom_call.1} parent=0 // pred_fallthru
    _
  // Predicated region
  $region18: #{tpu_custom_call.1} parent=0 // pred_check
    _
  $region19: #{tpu_custom_call.1} parent=0 // pred_check_branch
    %322 = sbr.rel (0) target = $region21
  $region20: #{tpu_custom_call.1} parent=0 // pred_region
    _
  $region21: #{tpu_custom_call.1} parent=0 // pred_fallthru
    _

</llo_original>
